<compile_context>
chip_gen: v7x
topology: tpu7x:2x2x1
jax: 0.10.0
libtpu: 0.0.40
codegen_flags: <defaults>
</compile_context>

<pallas_src>
import collections
from functools import lru_cache

import jax
import jax.numpy as jnp
from jax.experimental import pallas as pl
from jax.experimental.pallas import tpu as pltpu

_LANE = 128
_MIB = 1024 * 1024

Plan = collections.namedtuple(
    "Plan",
    ["Mp", "Kp", "tm", "tn", "tk", "grid_m", "grid_n", "grid_k",
     "w_buffers", "vmem_limit_bytes"],
)


def _cdiv(a, b):
    return -(-a // b)


def _round_up(a, b):
    return _cdiv(a, b) * b


def _sublane_multiple(dtype):
    # 32-bit -> 8 rows per vreg, bf16 -> 16, int8/fp8 -> 32 (sub-32-bit dtypes
    # pack along sublanes; an 8-row bf16 tile would half-fill every vreg).
    return max(8, 256 // (jnp.dtype(dtype).itemsize * 8))


@lru_cache(maxsize=None)
def _vmem_physical_bytes():
    try:
        cap = int(getattr(pltpu.get_tpu_info(), "vmem_capacity_bytes", 0))
        if cap > 0:
            return cap
    except Exception:  # query unavailable (interpret mode, old runtime, ...)
        pass
    return 64 * _MIB  # conservative fallback: v7x per-TensorCore VMEM


@lru_cache(maxsize=None)
def _tensorcores_per_chip():
    # Perf hint only (never affects correctness): v4/v5p megacore and v7x have
    # two TensorCores that `dimension_semantics="parallel"` shards grid work
    # across.  v5e/v6e have one TC, so we must not shrink tiles there.
    try:
        kind = jax.devices()[0].device_kind.lower()
    except Exception:
        return 1
    return 2 if any(tag in kind for tag in ("v4", "v5p", "7")) else 1


@lru_cache(maxsize=None)
def _buffered_one_ok():
    """Probe once whether this JAX build accepts pl.Buffered(1) BlockSpecs.

    The broad `except` is confined to this tiny isolated probe so genuine
    compile/runtime errors of the real kernel are never masked.
    """
    def _copy(x_ref, o_ref):
        o_ref[...] = x_ref[...]

    try:
        fn = pl.pallas_call(
            _copy,
            out_shape=jax.ShapeDtypeStruct((8, _LANE), jnp.float32),
            grid=(1,),
            in_specs=[pl.BlockSpec((8, _LANE), lambda i: (0, 0),
                                   pipeline_mode=pl.Buffered(1))],
            out_specs=pl.BlockSpec((8, _LANE), lambda i: (0, 0)),
        )
        jax.block_until_ready(fn(jnp.zeros((8, _LANE), jnp.float32)))
        return True
    except Exception:  # noqa: BLE001 - isolated capability probe
        return False


def _plan(M, K, compute_dtype, out_dtype, vmem_budget_bytes=None):
    """Pick tiling / grid from shapes and a per-generation VMEM budget."""
    csize = jnp.dtype(compute_dtype).itemsize
    osize = jnp.dtype(out_dtype).itemsize
    sub = _sublane_multiple(compute_dtype)
    phys = _vmem_physical_bytes()
    budget = int(phys * 0.45) if vmem_budget_bytes is None else int(vmem_budget_bytes)
    vmem_limit = min(int(phys * 0.75), 128 * _MIB)
    cores = _tensorcores_per_chip()

    def xo_bytes(tm, tn, tk, with_acc):
        b = 2 * tm * tk * csize           # x tile, double buffered
        b += 2 * tm * tn * osize          # output tile, double buffered
        if with_acc:
            b += tm * tn * 4              # f32 accumulator scratch
        return b

    def split_m(tm_cap):
        """Rebalanced m-tiling: avoids padding up to tm-1 wasted rows."""
        grid_m = _cdiv(M, tm_cap)
        tm = _round_up(_cdiv(M, grid_m), sub)
        return grid_m, tm, grid_m * tm

    # ---- preferred layout: whole (padded) weight resident in VMEM ----------
    # grid = (grid_m, grid_n<=2), no K reduction axis, weight read from HBM
    # exactly once per call.
    Kp = _round_up(K, _LANE)
    w_bytes = Kp * Kp * csize
    row_cap = min(_round_up(M, sub), 2048)

    for w_buffers in (2, 1):
        if w_buffers * w_bytes + xo_bytes(sub, Kp, Kp, False) > budget:
            continue                       # weight (+ minimal x/out) won't fit
        if w_buffers == 1 and not _buffered_one_ok():
            continue
        tm = row_cap                       # grow tm: extra m-tiles re-stream W
        while w_buffers * w_bytes + xo_bytes(tm, Kp, Kp, False) > budget:
            tm -= sub
        grid_m, tm, Mp = split_m(tm)
        grid_n, tn, tk = 1, Kp, Kp
        # Two TensorCores (v7x / megacore): split the weight columns so both
        # cores get "parallel" grid work; footprint is unchanged (two
        # half-width tiles double-buffered == one full tile double-buffered).
        if (cores >= 2 and grid_m == 1 and w_buffers == 2
                and Kp % (2 * _LANE) == 0):
            grid_n, tn = 2, Kp // 2
        return Plan(Mp, Kp, tm, tn, tk, grid_m, grid_n, 1, w_buffers, vmem_limit)

    # ---- fallback for very large H*W: tile columns + contraction ------------
    grid_m, tm, Mp = split_m(min(_round_up(M, sub), 512))
    T = (min(Kp, 4096) // _LANE) * _LANE
    while T > _LANE and (2 * T * T * csize + xo_bytes(tm, T, T, True)) > budget:
        T -= _LANE
    Kp = _round_up(K, T)                   # pad K up to a tile multiple (exact)
    return Plan(Mp, Kp, tm, T, T, grid_m, Kp // T, Kp // T, 2, vmem_limit)


# ---------------------------------------------------------------------------
# Kernels
# ---------------------------------------------------------------------------
def _fc_kernel_direct(x_ref, w_ref, o_ref):
    # Whole contraction covered by one tile: store straight to the output
    # (no f32 scratch, no predicated init/finalize paths).
    o_ref[...] = jnp.dot(
        x_ref[...], w_ref[...], preferred_element_type=jnp.float32
    ).astype(o_ref.dtype)


def _fc_kernel_accum(x_ref, w_ref, o_ref, acc_ref):
    @pl.when(pl.program_id(2) == 0)
    def _init():
        acc_ref[...] = jnp.zeros_like(acc_ref)

    acc_ref[...] += jnp.dot(
        x_ref[...], w_ref[...], preferred_element_type=jnp.float32
    )

    @pl.when(pl.program_id(2) == pl.num_programs(2) - 1)
    def _finalize():
        o_ref[...] = acc_ref[...].astype(o_ref.dtype)


def _build_call(plan, out_dtype):
    if plan.grid_k == 1:
        w_kwargs = {}
        if plan.w_buffers == 1:
            # Constant weight block index across the grid -> one VMEM copy.
            w_kwargs["pipeline_mode"] = pl.Buffered(1)
        return pl.pallas_call(
            _fc_kernel_direct,
            out_shape=jax.ShapeDtypeStruct((plan.Mp, plan.Kp), out_dtype),
            grid_spec=pltpu.PrefetchScalarGridSpec(
                num_scalar_prefetch=0,
                grid=(plan.grid_m, plan.grid_n),
                in_specs=[
                    pl.BlockSpec((plan.tm, plan.tk), lambda i, j: (i, 0)),
                    pl.BlockSpec((plan.tk, plan.tn), lambda i, j: (0, j),
                                 **w_kwargs),
                ],
                out_specs=pl.BlockSpec((plan.tm, plan.tn), lambda i, j: (i, j)),
            ),
            compiler_params=pltpu.CompilerParams(
                dimension_semantics=("parallel", "parallel"),
                vmem_limit_bytes=plan.vmem_limit_bytes,
            ),
        )
    # Large-K fallback: 3-axis grid, reduction innermost, f32 accumulator.
    return pl.pallas_call(
        _fc_kernel_accum,
        out_shape=jax.ShapeDtypeStruct((plan.Mp, plan.Kp), out_dtype),
        grid_spec=pltpu.PrefetchScalarGridSpec(
            num_scalar_prefetch=0,
            grid=(plan.grid_m, plan.grid_n, plan.grid_k),
            in_specs=[
                pl.BlockSpec((plan.tm, plan.tk), lambda i, j, k: (i, k)),
                pl.BlockSpec((plan.tk, plan.tn), lambda i, j, k: (k, j)),
            ],
            out_specs=pl.BlockSpec((plan.tm, plan.tn), lambda i, j, k: (i, j)),
            scratch_shapes=[pltpu.VMEM((plan.tm, plan.tn), jnp.float32)],
        ),
        compiler_params=pltpu.CompilerParams(
            dimension_semantics=("parallel", "parallel", "arbitrary"),
            vmem_limit_bytes=plan.vmem_limit_bytes,
        ),
    )


# ---------------------------------------------------------------------------
# Public API
# ---------------------------------------------------------------------------
def prepare_channel_wise_fc_weight(weight, x_shape, *,
                                   compute_dtype=jnp.bfloat16,
                                   out_dtype=jnp.float32,
                                   vmem_budget_bytes=None):
    """Pad + cast the (H*W, H*W) weight ONCE (e.g. at model init).

    The pad/cast each re-stream the full K*K matrix through HBM; doing them
    per forward call costs 2-3x the kernel's own traffic on this
    weight-bandwidth-bound op.
    """
    N, C, H, W = x_shape
    M, K = N * C, H * W
    if weight.shape != (K, K):
        raise ValueError(f"weight must be ({K}, {K}), got {weight.shape}")
    plan = _plan(M, K, compute_dtype, out_dtype, vmem_budget_bytes)
    if plan.Kp != K:
        weight = jnp.pad(weight, ((0, plan.Kp - K), (0, plan.Kp - K)))
    return weight.astype(compute_dtype)


def channel_wise_fc(x, weight, *, compute_dtype=jnp.bfloat16,
                    vmem_budget_bytes=None):
    """ChannelWiseFC forward: x (N,C,H,W) -> (N*C,H*W) @ W -> (N,C,H,W).

    `weight` may be the raw (H*W, H*W) parameter or the result of
    `prepare_channel_wise_fc_weight` (preferred: no per-call pad/cast traffic).

    Note: the default bf16 compute path keeps ~3 significant digits on inputs
    (accumulation is f32); pass compute_dtype=jnp.float32 for torch parity.
    """
    N, C, H, W = x.shape
    M, K = N * C, H * W
    out_dtype = x.dtype
    plan = _plan(M, K, compute_dtype, out_dtype, vmem_budget_bytes)

    x2d = x.reshape(M, K)
    if (plan.Mp, plan.Kp) != (M, K):
        x2d = jnp.pad(x2d, ((0, plan.Mp - M), (0, plan.Kp - K)))
    if x2d.dtype != jnp.dtype(compute_dtype):
        x2d = x2d.astype(compute_dtype)

    if weight.shape == (plan.Kp, plan.Kp) and weight.dtype == jnp.dtype(compute_dtype):
        w = weight                                    # already prepared
    elif weight.shape == (K, K):
        w = weight
        if plan.Kp != K:
            w = jnp.pad(w, ((0, plan.Kp - K), (0, plan.Kp - K)))
        if w.dtype != jnp.dtype(compute_dtype):
            w = w.astype(compute_dtype)
    else:
        raise ValueError(
            f"weight shape {weight.shape} matches neither raw ({K},{K}) nor "
            f"prepared ({plan.Kp},{plan.Kp})")

    out2d = _build_call(plan, out_dtype)(x2d, w)
    if (plan.Mp, plan.Kp) != (M, K):
        out2d = out2d[:M, :K]
    return out2d.reshape(N, C, H, W)


# ---------------------------------------------------------------------------
# Self-test
# ---------------------------------------------------------------------------
if __name__ == "__main__":
    def make_inputs(key, N, C, H, W):
        kx, kw = jax.random.split(key)
        x = jax.random.normal(kx, (N, C, H, W), dtype=jnp.float32)
        # Matches torch: weight.data.uniform_(0, 0.1)
        w = jax.random.uniform(kw, (H * W, H * W), dtype=jnp.float32,
                               minval=0.0, maxval=0.1)
        return x, w

    # 1) module-sized input; weight prepared once (pad/cast hoisted out of the
    #    hot path), forward jitted.  bf16 MXU path, f32 accumulation.
    N, C, H, W = 2, 4, 16, 16
    x, w = make_inputs(jax.random.PRNGKey(0), N, C, H, W)
    w_prep = prepare_channel_wise_fc_weight(w, x.shape)
    fwd = jax.jit(channel_wise_fc)
    out = jax.block_until_ready(fwd(x, w_prep))
    ref = (x.reshape(N * C, H * W) @ w).reshape(N, C, H, W)
    assert out.shape == (N, C, H, W)
    assert jnp.allclose(out, ref, atol=5e-2, rtol=5e-2), "bf16 path mismatch"

    # 2) f32 compute path (torch-level parity), raw weight passed directly.
    out32 = jax.block_until_ready(
        channel_wise_fc(x, w, compute_dtype=jnp.float32))
    assert jnp.allclose(out32, ref, atol=1e-4, rtol=1e-4), "f32 path mismatch"

    # 3) awkward H*W (row + column padding) with a tiny forced VMEM budget so
    #    the tiled K-reduction / accumulator fallback path is also exercised.
    N2, C2, H2, W2 = 2, 3, 24, 30             # M=6, K=720 -> Kp padded to tiles
    x2, w2 = make_inputs(jax.random.PRNGKey(1), N2, C2, H2, W2)
    out2 = jax.block_until_ready(
        channel_wise_fc(x2, w2, compute_dtype=jnp.float32,
                        vmem_budget_bytes=1 * _MIB))
    ref2 = (x2.reshape(N2 * C2, H2 * W2) @ w2).reshape(N2, C2, H2, W2)
    assert jnp.allclose(out2, ref2, atol=1e-4, rtol=1e-4), "tiled path mismatch"

    print("KERNEL_OK")
</pallas_src>

<mosaic_0001>
module attributes {stable_mosaic.version = 11 : i64} {
  func.func @_fc_kernel_direct(%arg0: i32, %arg1: i32, %arg2: memref<16x256xbf16, #tpu.memory_space<vmem>>, %arg3: memref<256x256xbf16, #tpu.memory_space<vmem>>, %arg4: memref<16x256xf32, #tpu.memory_space<vmem>>) attributes {dimension_semantics = [#tpu.dimension_semantics<parallel>, #tpu.dimension_semantics<parallel>], iteration_bounds = array<i64: 1, 1>, scalar_prefetch = 0 : i64, scratch_operands = 0 : i64, tpu.core_type = #tpu.core_type<tc>, window_params = [{transform_indices = @transform_0, window_bounds = array<i64: 16, 256>}, {transform_indices = @transform_1, window_bounds = array<i64: 256, 256>}, {transform_indices = @transform_2, window_bounds = array<i64: 16, 256>}]} {
    %c0 = arith.constant 0 : index
    %c0_0 = arith.constant 0 : index
    %0 = vector.load %arg2[%c0, %c0_0] : memref<16x256xbf16, #tpu.memory_space<vmem>>, vector<16x256xbf16>
    %c0_1 = arith.constant 0 : index
    %c0_2 = arith.constant 0 : index
    %1 = vector.load %arg3[%c0_1, %c0_2] : memref<256x256xbf16, #tpu.memory_space<vmem>>, vector<256x256xbf16>
    %cst = arith.constant dense<0.000000e+00> : vector<16x256xf32>
    %2 = tpu.matmul %0, %1, %cst {dimension_numbers = #tpu.dot_dimension_numbers<[1], [0], [0], [1], [0, 0, 1, 1], [], []>} : vector<16x256xbf16>, vector<256x256xbf16>, vector<16x256xf32> -> vector<16x256xf32>
    %c0_3 = arith.constant 0 : index
    %c0_4 = arith.constant 0 : index
    %3 = vector.load %arg4[%c0_3, %c0_4] : memref<16x256xf32, #tpu.memory_space<vmem>>, vector<16x256xf32>
    tpu.vector_store %arg4[%c0_3, %c0_4], %2 {strides = array<i32>} : memref<16x256xf32, #tpu.memory_space<vmem>>, vector<16x256xf32>,
    return
  }
  func.func @transform_0(%arg0: i32, %arg1: i32) -> (i32, i32) {
    %c0_i32 = arith.constant 0 : i32
    %c0_i32_0 = arith.constant 0 : i32
    return %arg0, %c0_i32 : i32, i32
  }
  func.func @transform_1(%arg0: i32, %arg1: i32) -> (i32, i32) {
    %c0_i32 = arith.constant 0 : i32
    %c0_i32_0 = arith.constant 0 : i32
    return %c0_i32, %arg1 : i32, i32
  }
  func.func @transform_2(%arg0: i32, %arg1: i32) -> (i32, i32) {
    %c0_i32 = arith.constant 0 : i32
    return %arg0, %arg1 : i32, i32
  }
}

</mosaic_0001>

<llo_original>
// kernel: channel_wise_fc.1
$region0: #{channel_wise_fc.1}
  #allocation0 [shape = 'u32[]', space=smem, size = 0x4, offset = 0x4, fixed_abs, tag = 'smem constant byte address 0x4 - core index']
  #allocation1 [shape = 'u32[144,128]{1,0:T(1,128)}', space=vmem, size = 0x12000, scoped, tag = 'internal scratch']
  %s0 = inlined_call_operand.vmem [shape: bf16[16,256], index: 0, kind: input, shape index: {}]
  %s1 = inlined_call_operand.vmem [shape: bf16[256,256], index: 1, kind: input, shape index: {}]
  %s2 = inlined_call_operand.vmem [shape: f32[16,256], index: 2, kind: output, shape index: {}]
  %s3 = sld [smem:[#allocation0]]
  $region18: #{channel_wise_fc.1} parent=0
    _
  %s5 = ssub.s32 1, %s3
  %s6 = scalar_select 0, %s5, %s3
  // Predicated region
  $region2: #{channel_wise_fc.1} parent=0 // pred_check
    _
  $region3: #{channel_wise_fc.1} parent=0 // pred_check_branch
    %8 = sbr.rel (0) target = $region5
  $region4: #{channel_wise_fc.1} parent=0 // pred_region
    _
  $region5: #{channel_wise_fc.1} parent=0 // pred_fallthru
    _
  // Predicated region
  $region6: #{channel_wise_fc.1} parent=0 // pred_check
    _
  $region7: #{channel_wise_fc.1} parent=0 // pred_check_branch
    %10 = sbr.rel (0) target = $region9
  $region8: #{channel_wise_fc.1} parent=0 // pred_region
    _
  $region9: #{channel_wise_fc.1} parent=0 // pred_fallthru
    _
  %v11 = vld [vmem:[%s0] sm:$0xff]
  %v12 = vld [vmem:[%s0 + $0x8] sm:$0xff]
  %v13 = vld [vmem:[%s1] sm:$0xff]
  %v14 = vld [vmem:[%s1 + $0x8] sm:$0xff]
  %v15 = vld [vmem:[%s1 + $0x10] sm:$0xff]
  %v16 = vld [vmem:[%s1 + $0x18] sm:$0xff]
  %v17 = vld [vmem:[%s1 + $0x20] sm:$0xff]
  %v18 = vld [vmem:[%s1 + $0x28] sm:$0xff]
  %v19 = vld [vmem:[%s1 + $0x30] sm:$0xff]
  %v20 = vld [vmem:[%s1 + $0x38] sm:$0xff]
  %v21 = vld [vmem:[%s1 + $0x40] sm:$0xff]
  %v22 = vld [vmem:[%s1 + $0x48] sm:$0xff]
  %v23 = vld [vmem:[%s1 + $0x50] sm:$0xff]
  %v24 = vld [vmem:[%s1 + $0x58] sm:$0xff]
  %v25 = vld [vmem:[%s1 + $0x60] sm:$0xff]
  %v26 = vld [vmem:[%s1 + $0x68] sm:$0xff]
  %v27 = vld [vmem:[%s1 + $0x70] sm:$0xff]
  %v28 = vld [vmem:[%s1 + $0x78] sm:$0xff]
  %v29 = vld [vmem:[%s1 + $0x80] sm:$0xff]
  %v30 = vld [vmem:[%s1 + $0x88] sm:$0xff]
  %v31 = vld [vmem:[%s1 + $0x90] sm:$0xff]
  %v32 = vld [vmem:[%s1 + $0x98] sm:$0xff]
  %v33 = vld [vmem:[%s1 + $0xa0] sm:$0xff]
  %v34 = vld [vmem:[%s1 + $0xa8] sm:$0xff]
  %v35 = vld [vmem:[%s1 + $0xb0] sm:$0xff]
  %v36 = vld [vmem:[%s1 + $0xb8] sm:$0xff]
  %v37 = vld [vmem:[%s1 + $0xc0] sm:$0xff]
  %v38 = vld [vmem:[%s1 + $0xc8] sm:$0xff]
  %v39 = vld [vmem:[%s1 + $0xd0] sm:$0xff]
  %v40 = vld [vmem:[%s1 + $0xd8] sm:$0xff]
  %v41 = vld [vmem:[%s1 + $0xe0] sm:$0xff]
  %v42 = vld [vmem:[%s1 + $0xe8] sm:$0xff]
  %v43 = vld [vmem:[%s1 + $0xf0] sm:$0xff]
  %v44 = vld [vmem:[%s1 + $0xf8] sm:$0xff]
  %v47 = vunpack.c.l.b16 %v11
  %v48 = vunpack.c.h.b16 %v11
  %v49 = vunpack.c.l.b16 %v12
  %v50 = vunpack.c.h.b16 %v12
  %v51 = vpack.c.b16 %v49, %v47
  %v52 = vpack.c.b16 %v50, %v48
  %v87 = vunpack.c.l.b16 %v13
  %v88 = vunpack.c.h.b16 %v13
  %v89 = vunpack.c.l.b16 %v14
  %v90 = vunpack.c.h.b16 %v14
  %v91 = vunpack.c.l.b16 %v15
  %v92 = vunpack.c.h.b16 %v15
  %v93 = vunpack.c.l.b16 %v16
  %v94 = vunpack.c.h.b16 %v16
  %v95 = vunpack.c.l.b16 %v17
  %v96 = vunpack.c.h.b16 %v17
  %v97 = vunpack.c.l.b16 %v18
  %v98 = vunpack.c.h.b16 %v18
  %v99 = vunpack.c.l.b16 %v19
  %v100 = vunpack.c.h.b16 %v19
  %v101 = vunpack.c.l.b16 %v20
  %v102 = vunpack.c.h.b16 %v20
  %v103 = vunpack.c.l.b16 %v21
  %v104 = vunpack.c.h.b16 %v21
  %v105 = vunpack.c.l.b16 %v22
  %v106 = vunpack.c.h.b16 %v22
  %v107 = vunpack.c.l.b16 %v23
  %v108 = vunpack.c.h.b16 %v23
  %v109 = vunpack.c.l.b16 %v24
  %v110 = vunpack.c.h.b16 %v24
  %v111 = vunpack.c.l.b16 %v25
  %v112 = vunpack.c.h.b16 %v25
  %v113 = vunpack.c.l.b16 %v26
  %v114 = vunpack.c.h.b16 %v26
  %v115 = vunpack.c.l.b16 %v27
  %v116 = vunpack.c.h.b16 %v27
  %v117 = vunpack.c.l.b16 %v28
  %v118 = vunpack.c.h.b16 %v28
  %v119 = vunpack.c.l.b16 %v29
  %v120 = vunpack.c.h.b16 %v29
  %v121 = vunpack.c.l.b16 %v30
  %v122 = vunpack.c.h.b16 %v30
  %v123 = vunpack.c.l.b16 %v31
  %v124 = vunpack.c.h.b16 %v31
  %v125 = vunpack.c.l.b16 %v32
  %v126 = vunpack.c.h.b16 %v32
  %v127 = vunpack.c.l.b16 %v33
  %v128 = vunpack.c.h.b16 %v33
  %v129 = vunpack.c.l.b16 %v34
  %v130 = vunpack.c.h.b16 %v34
  %v131 = vunpack.c.l.b16 %v35
  %v132 = vunpack.c.h.b16 %v35
  %v133 = vunpack.c.l.b16 %v36
  %v134 = vunpack.c.h.b16 %v36
  %v135 = vunpack.c.l.b16 %v37
  %v136 = vunpack.c.h.b16 %v37
  %v137 = vunpack.c.l.b16 %v38
  %v138 = vunpack.c.h.b16 %v38
  %v139 = vunpack.c.l.b16 %v39
  %v140 = vunpack.c.h.b16 %v39
  %v141 = vunpack.c.l.b16 %v40
  %v142 = vunpack.c.h.b16 %v40
  %v143 = vunpack.c.l.b16 %v41
  %v144 = vunpack.c.h.b16 %v41
  %v145 = vunpack.c.l.b16 %v42
  %v146 = vunpack.c.h.b16 %v42
  %v147 = vunpack.c.l.b16 %v43
  %v148 = vunpack.c.h.b16 %v43
  %v149 = vunpack.c.l.b16 %v44
  %v150 = vunpack.c.h.b16 %v44
  %v151 = vpack.c.b16 %v89, %v87
  %v152 = vpack.c.b16 %v90, %v88
  %v153 = vpack.c.b16 %v93, %v91
  %v154 = vpack.c.b16 %v94, %v92
  %v155 = vpack.c.b16 %v97, %v95
  %v156 = vpack.c.b16 %v98, %v96
  %v157 = vpack.c.b16 %v101, %v99
  %v158 = vpack.c.b16 %v102, %v100
  %v159 = vpack.c.b16 %v105, %v103
  %v160 = vpack.c.b16 %v106, %v104
  %v161 = vpack.c.b16 %v109, %v107
  %v162 = vpack.c.b16 %v110, %v108
  %v163 = vpack.c.b16 %v113, %v111
  %v164 = vpack.c.b16 %v114, %v112
  %v165 = vpack.c.b16 %v117, %v115
  %v166 = vpack.c.b16 %v118, %v116
  %v167 = vpack.c.b16 %v121, %v119
  %v168 = vpack.c.b16 %v122, %v120
  %v169 = vpack.c.b16 %v125, %v123
  %v170 = vpack.c.b16 %v126, %v124
  %v171 = vpack.c.b16 %v129, %v127
  %v172 = vpack.c.b16 %v130, %v128
  %v173 = vpack.c.b16 %v133, %v131
  %v174 = vpack.c.b16 %v134, %v132
  %v175 = vpack.c.b16 %v137, %v135
  %v176 = vpack.c.b16 %v138, %v136
  %v177 = vpack.c.b16 %v141, %v139
  %v178 = vpack.c.b16 %v142, %v140
  %v179 = vpack.c.b16 %v145, %v143
  %v180 = vpack.c.b16 %v146, %v144
  %v181 = vpack.c.b16 %v149, %v147
  %v182 = vpack.c.b16 %v150, %v148
  %215 = vmatprep.subr.bf16.mxu0 %v152
  %216 = vmatpush1.bf16.msra.mxu0 %v151
  %217 = vmatprep.subr.bf16.mxu0 %v154
  %218 = vmatpush1.bf16.msra.mxu0 %v153
  %219 = vmatprep.subr.bf16.mxu0 %v156
  %220 = vmatpush1.bf16.msra.mxu0 %v155
  %221 = vmatprep.subr.bf16.mxu0 %v158
  %222 = vmatpush1.bf16.msra.mxu0 %v157
  %223 = vmatprep.subr.bf16.mxu0 %v160
  %224 = vmatpush1.bf16.msra.mxu0 %v159
  %225 = vmatprep.subr.bf16.mxu0 %v162
  %226 = vmatpush1.bf16.msra.mxu0 %v161
  %227 = vmatprep.subr.bf16.mxu0 %v164
  %228 = vmatpush1.bf16.msra.mxu0 %v163
  %229 = vmatprep.subr.bf16.mxu0 %v166
  %230 = vmatpush1.bf16.msra.mxu0 %v165
  %231 = vmatprep.subr.bf16.mxu0 %v168
  %232 = vmatpush1.bf16.msra.mxu0 %v167
  %233 = vmatprep.subr.bf16.mxu0 %v170
  %234 = vmatpush1.bf16.msra.mxu0 %v169
  %235 = vmatprep.subr.bf16.mxu0 %v172
  %236 = vmatpush1.bf16.msra.mxu0 %v171
  %237 = vmatprep.subr.bf16.mxu0 %v174
  %238 = vmatpush1.bf16.msra.mxu0 %v173
  %239 = vmatprep.subr.bf16.mxu0 %v176
  %240 = vmatpush1.bf16.msra.mxu0 %v175
  %241 = vmatprep.subr.bf16.mxu0 %v178
  %242 = vmatpush1.bf16.msra.mxu0 %v177
  %243 = vmatprep.subr.bf16.mxu0 %v180
  %244 = vmatpush1.bf16.msra.mxu0 %v179
  %245 = vmatprep.subr.bf16.mxu0 %v182
  %246 = vmatpush1.bf16.msra.mxu0 %v181
  %247 = vmatprep.mubr.bf16.mxu0 %v52
  %248 = vmatmul.mubr.bf16.gmra.mrb[0].mxu0 %v51
  %v249 = vpop.f32.mrb[0].mxu0
  %v250 = vadd.f32 0.0, %v249
  %v251 = vpop.f32.mrb[0].mxu0
  %v252 = vadd.f32 0.0, %v251
  %v253 = vpop.f32.mrb[0].mxu0
  %v254 = vadd.f32 0.0, %v253
  %v255 = vpop.f32.mrb[0].mxu0
  %v256 = vadd.f32 0.0, %v255
  %257 = vdwg.mxu0
  %258 = vst [vmem:[%s2] sm:$0xff] %v250
  %259 = vst [vmem:[%s2 + $0x8] sm:$0xff] %v252
  %260 = vst [vmem:[%s2 + $0x10] sm:$0xff] %v254
  %261 = vst [vmem:[%s2 + $0x18] sm:$0xff] %v256
  // Predicated region
  $region10: #{channel_wise_fc.1} parent=0 // pred_check
    _
  $region11: #{channel_wise_fc.1} parent=0 // pred_check_branch
    %263 = sbr.rel (0) target = $region13
  $region12: #{channel_wise_fc.1} parent=0 // pred_region
    _
  $region13: #{channel_wise_fc.1} parent=0 // pred_fallthru
    _
  // Predicated region
  $region14: #{channel_wise_fc.1} parent=0 // pred_check
    _
  $region15: #{channel_wise_fc.1} parent=0 // pred_check_branch
    %265 = sbr.rel (0) target = $region17
  $region16: #{channel_wise_fc.1} parent=0 // pred_region
    _
  $region17: #{channel_wise_fc.1} parent=0 // pred_fallthru
    _

</llo_original>
